<compile_context>
chip_gen: v5e
topology: v5e:2x2
jax: 0.10.0
libtpu: 0.0.40
codegen_flags: <defaults>
</compile_context>

<pallas_src>
import jax
import jax.numpy as jnp
from jax.experimental import pallas as pl
from jax.experimental.pallas import tpu as pltpu

_HIDDEN_SCAL = 100  # fixed hidden width of scaling_mlp_spd (from the PyTorch module)


def _round_up(x, m):
    return (x + m - 1) // m * m


def dos_split_kernel(x_ref, spd_ref, w1_ref, b1_ref, a1_ref, w2_ref, b2_ref,
                     w3_ref, b3_ref, a2_ref, w4_ref, b4_ref,
                     dos_ref, scal_ref):
    """One node tile.

    x_ref   : (TN, input_dim)  f32   node features
    spd_ref : (TN, max_spd)    f32
    w*/b*   : exact-shape weights/biases (resident in VMEM, constant index_map)
    a1/a2   : (1, 1) f32 PReLU alphas (broadcast)
    dos_ref : (TN, output_dim*max_spd) f32
    scal_ref: (TN, max_spd)            f32
    """
    x = x_ref[...]

    # ---- dos branch: Linear -> PReLU -> Linear -> Tanh -> Dropout(eval) -> (.+1)/2
    h1 = jnp.dot(x, w1_ref[...], preferred_element_type=jnp.float32) + b1_ref[...]
    h1 = jnp.where(h1 >= 0.0, h1, a1_ref[...] * h1)
    z1 = jnp.dot(h1, w2_ref[...], preferred_element_type=jnp.float32) + b2_ref[...]
    dos_ref[...] = ((jnp.tanh(z1) + 1.0) * 0.5).astype(dos_ref.dtype)

    # ---- scaling branch: Linear -> PReLU -> Linear -> ReLU, then * spd ----
    h2 = jnp.dot(x, w3_ref[...], preferred_element_type=jnp.float32) + b3_ref[...]
    h2 = jnp.where(h2 >= 0.0, h2, a2_ref[...] * h2)
    z2 = jnp.dot(h2, w4_ref[...], preferred_element_type=jnp.float32) + b4_ref[...]
    scal_ref[...] = (jnp.maximum(z2, 0.0) * spd_ref[...]).astype(scal_ref.dtype)


def dos_split_forward(node_feat, spd, params, *, output_dim, max_spd, tile_n=2048):
    N, input_dim = node_feat.shape
    H = _HIDDEN_SCAL
    D2 = output_dim * max_spd
    (w1, b1, a1, w2, b2, w3, b3, a2, w4, b4) = params

    # Node tiling: big tiles amortize the ~0.35 us per-grid-step overhead; when N
    # is small, split into >= 2 steps so the parallel axis can use both v7x TCs.
    n_rows = _round_up(max(N, 1), 8)
    tile_n = max(8, min(_round_up(tile_n, 8), n_rows))
    if n_rows > 8 and pl.cdiv(N, tile_n) < 2:
        tile_n = _round_up(pl.cdiv(n_rows, 2), 8)
    grid = (pl.cdiv(N, tile_n),)

    row = lambda i: (i, 0)   # node-tiled arrays
    rep = lambda i: (0, 0)   # weights / biases / alphas: resident, never re-fetched

    dos_flat, scaling = pl.pallas_call(
        dos_split_kernel,
        out_shape=(
            jax.ShapeDtypeStruct((N, D2), jnp.float32),
            jax.ShapeDtypeStruct((N, max_spd), jnp.float32),
        ),
        grid_spec=pltpu.PrefetchScalarGridSpec(
            num_scalar_prefetch=0,
            grid=grid,
            in_specs=[
                pl.BlockSpec((tile_n, input_dim), row),       # node features
                pl.BlockSpec((tile_n, max_spd), row),         # spd
                pl.BlockSpec((input_dim, output_dim), rep),   # W1
                pl.BlockSpec((1, output_dim), rep),           # b1
                pl.BlockSpec((1, 1), rep),                    # PReLU alpha (dos)
                pl.BlockSpec((output_dim, D2), rep),          # W2
                pl.BlockSpec((1, D2), rep),                   # b2
                pl.BlockSpec((input_dim, H), rep),            # W3
                pl.BlockSpec((1, H), rep),                    # b3
                pl.BlockSpec((1, 1), rep),                    # PReLU alpha (scaling)
                pl.BlockSpec((H, max_spd), rep),              # W4
                pl.BlockSpec((1, max_spd), rep),              # b4
            ],
            out_specs=(
                pl.BlockSpec((tile_n, D2), row),              # dos (starts at lane 0)
                pl.BlockSpec((tile_n, max_spd), row),         # scaling
            ),
        ),
        compiler_params=pltpu.CompilerParams(
            dimension_semantics=("parallel",)),
    )(node_feat, spd, w1, b1, a1, w2, b2, w3, b3, a2, w4, b4)

    return dos_flat.reshape(N, output_dim, max_spd), scaling


def init_params(key, input_dim, output_dim, max_spd):
    """Deterministic synthetic parameter init (shapes match the PyTorch module,
    Linear weights stored transposed: (in_features, out_features))."""
    H = _HIDDEN_SCAL
    D2 = output_dim * max_spd
    ks = jax.random.split(key, 8)
    scale = 0.1
    w1 = scale * jax.random.normal(ks[0], (input_dim, output_dim), jnp.float32)
    b1 = scale * jax.random.normal(ks[1], (1, output_dim), jnp.float32)
    w2 = scale * jax.random.normal(ks[2], (output_dim, D2), jnp.float32)
    b2 = scale * jax.random.normal(ks[3], (1, D2), jnp.float32)
    w3 = scale * jax.random.normal(ks[4], (input_dim, H), jnp.float32)
    b3 = scale * jax.random.normal(ks[5], (1, H), jnp.float32)
    w4 = scale * jax.random.normal(ks[6], (H, max_spd), jnp.float32)
    b4 = scale * jax.random.normal(ks[7], (1, max_spd), jnp.float32)
    a1 = jnp.full((1, 1), 0.25, jnp.float32)   # PReLU default init
    a2 = jnp.full((1, 1), 0.25, jnp.float32)
    return (w1, b1, a1, w2, b2, w3, b3, a2, w4, b4)


def reference_forward(node_feat, spd, params, *, output_dim, max_spd):
    (w1, b1, a1, w2, b2, w3, b3, a2, w4, b4) = params
    h1 = node_feat @ w1 + b1
    h1 = jnp.where(h1 >= 0, h1, a1[0, 0] * h1)
    h2 = h1 @ w2 + b2
    dos = ((jnp.tanh(h2) + 1.0) / 2.0).reshape(-1, output_dim, max_spd)
    s1 = node_feat @ w3 + b3
    s1 = jnp.where(s1 >= 0, s1, a2[0, 0] * s1)
    s2 = jnp.maximum(s1 @ w4 + b4, 0.0)
    return dos, s2 * spd


if __name__ == "__main__":
    input_dim, output_dim, max_spd = 32, 16, 4
    N = 16  # number of nodes (not required to divide the tile size)

    key = jax.random.PRNGKey(0)
    k_x, k_spd, k_p = jax.random.split(key, 3)
    node_feat = jax.random.normal(k_x, (N, input_dim), jnp.float32)
    spd = jax.random.uniform(k_spd, (N, max_spd), jnp.float32)
    params = init_params(k_p, input_dim, output_dim, max_spd)

    dos_ml, scaling = dos_split_forward(
        node_feat, spd, params, output_dim=output_dim, max_spd=max_spd)
    jax.block_until_ready((dos_ml, scaling))

    dos_ref, scal_ref = reference_forward(
        node_feat, spd, params, output_dim=output_dim, max_spd=max_spd)
    assert dos_ml.shape == (N, output_dim, max_spd)
    assert scaling.shape == (N, max_spd)
    # f32 path end to end; tolerance covers TPU matmul precision (MXU passes)
    # differences between the Pallas kernel and the XLA reference.
    assert jnp.allclose(dos_ml, dos_ref, atol=1e-2, rtol=1e-2)
    assert jnp.allclose(scaling, scal_ref, atol=1e-2, rtol=1e-2)

    print("KERNEL_OK")
</pallas_src>

<mosaic_0001>
module attributes {stable_mosaic.version = 11 : i64} {
  func.func @dos_split_kernel(%arg0: i32, %arg1: memref<8x32xf32, #tpu.memory_space<vmem>>, %arg2: memref<8x4xf32, #tpu.memory_space<vmem>>, %arg3: memref<32x16xf32, #tpu.memory_space<vmem>>, %arg4: memref<1x16xf32, #tpu.memory_space<vmem>>, %arg5: memref<1x1xf32, #tpu.memory_space<vmem>>, %arg6: memref<16x64xf32, #tpu.memory_space<vmem>>, %arg7: memref<1x64xf32, #tpu.memory_space<vmem>>, %arg8: memref<32x100xf32, #tpu.memory_space<vmem>>, %arg9: memref<1x100xf32, #tpu.memory_space<vmem>>, %arg10: memref<1x1xf32, #tpu.memory_space<vmem>>, %arg11: memref<100x4xf32, #tpu.memory_space<vmem>>, %arg12: memref<1x4xf32, #tpu.memory_space<vmem>>, %arg13: memref<8x64xf32, #tpu.memory_space<vmem>>, %arg14: memref<8x4xf32, #tpu.memory_space<vmem>>) attributes {dimension_semantics = [#tpu.dimension_semantics<parallel>], iteration_bounds = array<i64: 2>, scalar_prefetch = 0 : i64, scratch_operands = 0 : i64, tpu.core_type = #tpu.core_type<tc>, window_params = [{transform_indices = @transform_0, window_bounds = array<i64: 8, 32>}, {transform_indices = @transform_1, window_bounds = array<i64: 8, 4>}, {pipeline_mode = #tpu.pipeline_mode<synchronous>, transform_indices = @transform_2, window_bounds = array<i64: 32, 16>}, {pipeline_mode = #tpu.pipeline_mode<synchronous>, transform_indices = @transform_3, window_bounds = array<i64: 1, 16>}, {pipeline_mode = #tpu.pipeline_mode<synchronous>, transform_indices = @transform_4, window_bounds = array<i64: 1, 1>}, {pipeline_mode = #tpu.pipeline_mode<synchronous>, transform_indices = @transform_5, window_bounds = array<i64: 16, 64>}, {pipeline_mode = #tpu.pipeline_mode<synchronous>, transform_indices = @transform_6, window_bounds = array<i64: 1, 64>}, {pipeline_mode = #tpu.pipeline_mode<synchronous>, transform_indices = @transform_7, window_bounds = array<i64: 32, 100>}, {pipeline_mode = #tpu.pipeline_mode<synchronous>, transform_indices = @transform_8, window_bounds = array<i64: 1, 100>}, {pipeline_mode = #tpu.pipeline_mode<synchronous>, transform_indices = @transform_9, window_bounds = array<i64: 1, 1>}, {pipeline_mode = #tpu.pipeline_mode<synchronous>, transform_indices = @transform_10, window_bounds = array<i64: 100, 4>}, {pipeline_mode = #tpu.pipeline_mode<synchronous>, transform_indices = @transform_11, window_bounds = array<i64: 1, 4>}, {transform_indices = @transform_12, window_bounds = array<i64: 8, 64>}, {transform_indices = @transform_13, window_bounds = array<i64: 8, 4>}]} {
    %c0 = arith.constant 0 : index
    %c0_0 = arith.constant 0 : index
    %0 = vector.load %arg1[%c0, %c0_0] : memref<8x32xf32, #tpu.memory_space<vmem>>, vector<8x32xf32>
    %c0_1 = arith.constant 0 : index
    %c0_2 = arith.constant 0 : index
    %1 = vector.load %arg3[%c0_1, %c0_2] : memref<32x16xf32, #tpu.memory_space<vmem>>, vector<32x16xf32>
    %cst = arith.constant dense<0.000000e+00> : vector<8x16xf32>
    %2 = tpu.matmul %0, %1, %cst {dimension_numbers = #tpu.dot_dimension_numbers<[1], [0], [0], [1], [0, 0, 1, 1], [], []>} : vector<8x32xf32>, vector<32x16xf32>, vector<8x16xf32> -> vector<8x16xf32>
    %c0_3 = arith.constant 0 : index
    %c0_4 = arith.constant 0 : index
    %3 = vector.load %arg4[%c0_3, %c0_4] : memref<1x16xf32, #tpu.memory_space<vmem>>, vector<1x16xf32>
    %4 = vector.broadcast %3 : vector<1x16xf32> to vector<8x16xf32>
    %5 = arith.addf %2, %4 : vector<8x16xf32>
    %cst_5 = arith.constant 0.000000e+00 : f32
    %6 = vector.broadcast %cst_5 : f32 to vector<8x16xf32>
    %7 = arith.cmpf oge, %5, %6 : vector<8x16xf32>
    %c0_6 = arith.constant 0 : index
    %c0_7 = arith.constant 0 : index
    %8 = vector.load %arg5[%c0_6, %c0_7] : memref<1x1xf32, #tpu.memory_space<vmem>>, vector<1x1xf32>
    %9 = vector.broadcast %8 : vector<1x1xf32> to vector<8x16xf32>
    %10 = arith.mulf %9, %5 : vector<8x16xf32>
    %11 = arith.select %7, %5, %10 : vector<8x16xi1>, vector<8x16xf32>
    %c0_8 = arith.constant 0 : index
    %c0_9 = arith.constant 0 : index
    %12 = vector.load %arg6[%c0_8, %c0_9] : memref<16x64xf32, #tpu.memory_space<vmem>>, vector<16x64xf32>
    %cst_10 = arith.constant dense<0.000000e+00> : vector<8x64xf32>
    %13 = tpu.matmul %11, %12, %cst_10 {dimension_numbers = #tpu.dot_dimension_numbers<[1], [0], [0], [1], [0, 0, 1, 1], [], []>} : vector<8x16xf32>, vector<16x64xf32>, vector<8x64xf32> -> vector<8x64xf32>
    %c0_11 = arith.constant 0 : index
    %c0_12 = arith.constant 0 : index
    %14 = vector.load %arg7[%c0_11, %c0_12] : memref<1x64xf32, #tpu.memory_space<vmem>>, vector<1x64xf32>
    %15 = vector.broadcast %14 : vector<1x64xf32> to vector<8x64xf32>
    %16 = arith.addf %13, %15 : vector<8x64xf32>
    %17 = math.tanh %16 : vector<8x64xf32>
    %cst_13 = arith.constant 1.000000e+00 : f32
    %18 = vector.broadcast %cst_13 : f32 to vector<8x64xf32>
    %19 = arith.addf %17, %18 : vector<8x64xf32>
    %cst_14 = arith.constant 5.000000e-01 : f32
    %20 = vector.broadcast %cst_14 : f32 to vector<8x64xf32>
    %21 = arith.mulf %19, %20 : vector<8x64xf32>
    %c0_15 = arith.constant 0 : index
    %c0_16 = arith.constant 0 : index
    %22 = vector.load %arg13[%c0_15, %c0_16] : memref<8x64xf32, #tpu.memory_space<vmem>>, vector<8x64xf32>
    tpu.vector_store %arg13[%c0_15, %c0_16], %21 {strides = array<i32>} : memref<8x64xf32, #tpu.memory_space<vmem>>, vector<8x64xf32>,
    %c0_17 = arith.constant 0 : index
    %c0_18 = arith.constant 0 : index
    %23 = vector.load %arg8[%c0_17, %c0_18] : memref<32x100xf32, #tpu.memory_space<vmem>>, vector<32x100xf32>
    %cst_19 = arith.constant dense<0.000000e+00> : vector<8x100xf32>
    %24 = tpu.matmul %0, %23, %cst_19 {dimension_numbers = #tpu.dot_dimension_numbers<[1], [0], [0], [1], [0, 0, 1, 1], [], []>} : vector<8x32xf32>, vector<32x100xf32>, vector<8x100xf32> -> vector<8x100xf32>
    %c0_20 = arith.constant 0 : index
    %c0_21 = arith.constant 0 : index
    %25 = vector.load %arg9[%c0_20, %c0_21] : memref<1x100xf32, #tpu.memory_space<vmem>>, vector<1x100xf32>
    %26 = vector.broadcast %25 : vector<1x100xf32> to vector<8x100xf32>
    %27 = arith.addf %24, %26 : vector<8x100xf32>
    %cst_22 = arith.constant 0.000000e+00 : f32
    %28 = vector.broadcast %cst_22 : f32 to vector<8x100xf32>
    %29 = arith.cmpf oge, %27, %28 : vector<8x100xf32>
    %c0_23 = arith.constant 0 : index
    %c0_24 = arith.constant 0 : index
    %30 = vector.load %arg10[%c0_23, %c0_24] : memref<1x1xf32, #tpu.memory_space<vmem>>, vector<1x1xf32>
    %31 = vector.broadcast %30 : vector<1x1xf32> to vector<8x100xf32>
    %32 = arith.mulf %31, %27 : vector<8x100xf32>
    %33 = arith.select %29, %27, %32 : vector<8x100xi1>, vector<8x100xf32>
    %c0_25 = arith.constant 0 : index
    %c0_26 = arith.constant 0 : index
    %34 = vector.load %arg11[%c0_25, %c0_26] : memref<100x4xf32, #tpu.memory_space<vmem>>, vector<100x4xf32>
    %cst_27 = arith.constant dense<0.000000e+00> : vector<8x4xf32>
    %35 = tpu.matmul %33, %34, %cst_27 {dimension_numbers = #tpu.dot_dimension_numbers<[1], [0], [0], [1], [0, 0, 1, 1], [], []>} : vector<8x100xf32>, vector<100x4xf32>, vector<8x4xf32> -> vector<8x4xf32>
    %c0_28 = arith.constant 0 : index
    %c0_29 = arith.constant 0 : index
    %36 = vector.load %arg12[%c0_28, %c0_29] : memref<1x4xf32, #tpu.memory_space<vmem>>, vector<1x4xf32>
    %37 = vector.broadcast %36 : vector<1x4xf32> to vector<8x4xf32>
    %38 = arith.addf %35, %37 : vector<8x4xf32>
    %cst_30 = arith.constant 0.000000e+00 : f32
    %39 = vector.broadcast %cst_30 : f32 to vector<8x4xf32>
    %40 = arith.maximumf %38, %39 : vector<8x4xf32>
    %c0_31 = arith.constant 0 : index
    %c0_32 = arith.constant 0 : index
    %41 = vector.load %arg2[%c0_31, %c0_32] : memref<8x4xf32, #tpu.memory_space<vmem>>, vector<8x4xf32>
    %42 = arith.mulf %40, %41 : vector<8x4xf32>
    %c0_33 = arith.constant 0 : index
    %c0_34 = arith.constant 0 : index
    %43 = vector.load %arg14[%c0_33, %c0_34] : memref<8x4xf32, #tpu.memory_space<vmem>>, vector<8x4xf32>
    tpu.vector_store %arg14[%c0_33, %c0_34], %42 {strides = array<i32>} : memref<8x4xf32, #tpu.memory_space<vmem>>, vector<8x4xf32>,
    return
  }
  func.func @transform_0(%arg0: i32) -> (i32, i32) {
    %c0_i32 = arith.constant 0 : i32
    %c0_i32_0 = arith.constant 0 : i32
    return %arg0, %c0_i32 : i32, i32
  }
  func.func @transform_1(%arg0: i32) -> (i32, i32) {
    %c0_i32 = arith.constant 0 : i32
    %c0_i32_0 = arith.constant 0 : i32
    return %arg0, %c0_i32 : i32, i32
  }
  func.func @transform_2(%arg0: i32) -> (i32, i32) {
    %c0_i32 = arith.constant 0 : i32
    %c0_i32_0 = arith.constant 0 : i32
    %c0_i32_1 = arith.constant 0 : i32
    return %c0_i32, %c0_i32_0 : i32, i32
  }
  func.func @transform_3(%arg0: i32) -> (i32, i32) {
    %c0_i32 = arith.constant 0 : i32
    %c0_i32_0 = arith.constant 0 : i32
    %c0_i32_1 = arith.constant 0 : i32
    return %c0_i32, %c0_i32_0 : i32, i32
  }
  func.func @transform_4(%arg0: i32) -> (i32, i32) {
    %c0_i32 = arith.constant 0 : i32
    %c0_i32_0 = arith.constant 0 : i32
    %c0_i32_1 = arith.constant 0 : i32
    return %c0_i32, %c0_i32_0 : i32, i32
  }
  func.func @transform_5(%arg0: i32) -> (i32, i32) {
    %c0_i32 = arith.constant 0 : i32
    %c0_i32_0 = arith.constant 0 : i32
    %c0_i32_1 = arith.constant 0 : i32
    return %c0_i32, %c0_i32_0 : i32, i32
  }
  func.func @transform_6(%arg0: i32) -> (i32, i32) {
    %c0_i32 = arith.constant 0 : i32
    %c0_i32_0 = arith.constant 0 : i32
    %c0_i32_1 = arith.constant 0 : i32
    return %c0_i32, %c0_i32_0 : i32, i32
  }
  func.func @transform_7(%arg0: i32) -> (i32, i32) {
    %c0_i32 = arith.constant 0 : i32
    %c0_i32_0 = arith.constant 0 : i32
    %c0_i32_1 = arith.constant 0 : i32
    return %c0_i32, %c0_i32_0 : i32, i32
  }
  func.func @transform_8(%arg0: i32) -> (i32, i32) {
    %c0_i32 = arith.constant 0 : i32
    %c0_i32_0 = arith.constant 0 : i32
    %c0_i32_1 = arith.constant 0 : i32
    return %c0_i32, %c0_i32_0 : i32, i32
  }
  func.func @transform_9(%arg0: i32) -> (i32, i32) {
    %c0_i32 = arith.constant 0 : i32
    %c0_i32_0 = arith.constant 0 : i32
    %c0_i32_1 = arith.constant 0 : i32
    return %c0_i32, %c0_i32_0 : i32, i32
  }
  func.func @transform_10(%arg0: i32) -> (i32, i32) {
    %c0_i32 = arith.constant 0 : i32
    %c0_i32_0 = arith.constant 0 : i32
    %c0_i32_1 = arith.constant 0 : i32
    return %c0_i32, %c0_i32_0 : i32, i32
  }
  func.func @transform_11(%arg0: i32) -> (i32, i32) {
    %c0_i32 = arith.constant 0 : i32
    %c0_i32_0 = arith.constant 0 : i32
    %c0_i32_1 = arith.constant 0 : i32
    return %c0_i32, %c0_i32_0 : i32, i32
  }
  func.func @transform_12(%arg0: i32) -> (i32, i32) {
    %c0_i32 = arith.constant 0 : i32
    %c0_i32_0 = arith.constant 0 : i32
    return %arg0, %c0_i32 : i32, i32
  }
  func.func @transform_13(%arg0: i32) -> (i32, i32) {
    %c0_i32 = arith.constant 0 : i32
    %c0_i32_0 = arith.constant 0 : i32
    return %arg0, %c0_i32 : i32, i32
  }
}

</mosaic_0001>

<llo_original>
// kernel: tpu_custom_call.1
$region0: #{tpu_custom_call.1}
  #allocation0 [shape = 'u32[]', space=smem, size = 0x4, offset = 0x4, fixed_abs, tag = 'smem constant byte address 0x4 - core index']
  #allocation1 [shape = 'u32[72,128]{1,0:T(1,128)}', space=vmem, size = 0x9000, scoped, tag = 'internal scratch']
  #allocation2 [shape = 'f32[1,1]{1,0:T(1,128)S(1)}', space=vmem, size = 0x200, scoped, tag = 'scoped memory for tpu_custom_call.1']
  #allocation3 [shape = 'f32[1,1]{1,0:T(1,128)S(1)}', space=vmem, size = 0x200, scoped, tag = 'scoped memory for tpu_custom_call.1']
  %s0 = inlined_call_operand.vmem [shape: f32[16,32], index: 0, kind: input, shape index: {}]
  %s1 = inlined_call_operand.vmem [shape: f32[16,4], index: 1, kind: input, shape index: {}]
  %s2 = inlined_call_operand.vmem [shape: f32[32,16], index: 2, kind: input, shape index: {}]
  %s3 = inlined_call_operand.vmem [shape: f32[1,16], index: 3, kind: input, shape index: {}]
  %s4 = inlined_call_operand.<no memory space> [shape: f32[1,1], index: 4, kind: input, shape index: {}]
  %s5 = inlined_call_operand.vmem [shape: f32[16,64], index: 5, kind: input, shape index: {}]
  %s6 = inlined_call_operand.vmem [shape: f32[1,64], index: 6, kind: input, shape index: {}]
  %s7 = inlined_call_operand.vmem [shape: f32[32,100], index: 7, kind: input, shape index: {}]
  %s8 = inlined_call_operand.vmem [shape: f32[1,100], index: 8, kind: input, shape index: {}]
  %s9 = inlined_call_operand.<no memory space> [shape: f32[1,1], index: 9, kind: input, shape index: {}]
  %s10 = inlined_call_operand.vmem [shape: f32[100,4], index: 10, kind: input, shape index: {}]
  %s11 = inlined_call_operand.vmem [shape: f32[1,4], index: 11, kind: input, shape index: {}]
  %s12 = inlined_call_operand.hbm [shape: f32[16,64], index: 12, kind: output, shape index: {0}]
  %s13 = inlined_call_operand.vmem [shape: f32[16,4], index: 13, kind: output, shape index: {1}]
  %14 = xla_tuple %s12, %s13
  %s15 = sld [smem:[#allocation0]]
  $region89: #{tpu_custom_call.1} parent=0
    _
  %s17 = ssub.s32 1, %s15
  %s18 = scalar_select 0, %s17, %s15
  %v19 = vstv %s4
  %20 = vst [vmem:[#allocation2] sm:$0x1] %v19
  %v21 = vstv %s9
  %22 = vst [vmem:[#allocation3] sm:$0x1] %v21
  $region1: #{tpu_custom_call.1} parent=0
    #allocation4 [shape = 'u8[8192]{0}', space=vmem, size = 0x2000, scoped, tag = 'output window, operand 0']
    #allocation5 [shape = 's32[2]{0}', space=sflag, size = 0x8, scoped, tag = 'scoped memory for tpu_custom_call.1']
    %23 = vsyncpa [#allocation5], 0
    %s24 = scalar_lea.sflag [#allocation5], 1
    %25 = vsyncpa %s24, 0
    loop: start=0, step=1, limit=4
    $region2: #{tpu_custom_call.1} parent=1 // loop_pre_header
      _
    $region3: #{tpu_custom_call.1} parent=1 // loop_header
      %s27 = sphi 0, %s31
      %p28 = scmp.ge.s32.totalorder %s27, 4
      %s37 = sphi 0, %s39
      %s40 = sphi 0, %s37
      %s41 = sphi 0, %s40
      %s57 = sphi 0, %s41
      %s63 = sphi 0, %s65
      %s66 = sphi 0, %s63
      %s67 = sphi 0, %s66
      %s83 = sphi 0, %s67
      %s87 = sphi 0, %s87
      %s89 = sphi 0, %s87
      %s90 = sphi 0, %s89
      %s104 = sphi 0, %s90
      %s108 = sphi 0, %s108
      %s110 = sphi 0, %s108
      %s111 = sphi 0, %s110
      %s125 = sphi 0, %s111
      %s129 = sphi 0, %s129
      %s131 = sphi 0, %s129
      %s132 = sphi 0, %s131
      %s146 = sphi 0, %s132
      %s150 = sphi 0, %s150
      %s152 = sphi 0, %s150
      %s153 = sphi 0, %s152
      %s167 = sphi 0, %s153
      %s171 = sphi 0, %s171
      %s173 = sphi 0, %s171
      %s174 = sphi 0, %s173
      %s188 = sphi 0, %s174
      %s192 = sphi 0, %s192
      %s194 = sphi 0, %s192
      %s195 = sphi 0, %s194
      %s209 = sphi 0, %s195
      %s213 = sphi 0, %s213
      %s215 = sphi 0, %s213
      %s216 = sphi 0, %s215
      %s230 = sphi 0, %s216
      %s234 = sphi 0, %s234
      %s236 = sphi 0, %s234
      %s237 = sphi 0, %s236
      %s251 = sphi 0, %s237
      %s255 = sphi 0, %s255
      %s257 = sphi 0, %s255
      %s258 = sphi 0, %s257
      %s272 = sphi 0, %s258
      %s276 = sphi 0, %s276
      %s278 = sphi 0, %s276
      %s279 = sphi 0, %s278
      %s293 = sphi 0, %s279
      %s299 = sphi 0, %s301
      %s302 = sphi 0, %s299
      %s303 = sphi 0, %s302
      %s319 = sphi 0, %s303
      %s325 = sphi 0, %s327
      %s328 = sphi 0, %s325
      %s329 = sphi 0, %s328
      %s345 = sphi 0, %s329
    $region4: #{tpu_custom_call.1} parent=1 // loop_header_branch
      %30 = sbr.rel (%p28) target = $region8
    $region5: #{tpu_custom_call.1} parent=1 // loop_body
      %s32 = ssub.s32 %s27, 1
      %s33 = ssub.s32 %s27, 2
      %s34 = sadd.s32 %s27, 1
      %s35 = ssub.s32 %s27, %s34
      %p36 = scmp.eq.s32.totalorder %s35, 0
      %s38 = sadd.s32 %s37, 1
      %s39 = scalar_select %p36, %s37, %s38
      %p42 = pneg %p36
      %p43 = scmp.eq.s32.totalorder %s27, 1
      %p44 = por %p42, %p43
      %p45 = scmp.ne.s32.totalorder %s37, %s40
      %p46 = scmp.eq.s32.totalorder %s27, 0
      %p47 = por %p45, %p46
      %p48 = scmp.ne.s32.totalorder %s37, %s40
      %p49 = scmp.eq.s32.totalorder %s32, 1
      %p50 = por %p48, %p49
      %p51 = scmp.ne.s32.totalorder %s40, %s41
      %p52 = scmp.eq.s32.totalorder %s32, 0
      %p53 = por %p51, %p52
      %p54 = scmp.ne.s32.totalorder %s40, %s41
      %p55 = scmp.eq.s32.totalorder %s33, 1
      %p56 = por %p54, %p55
      %p58 = scmp.ne.s32.totalorder %s41, %s57
      %p59 = scmp.eq.s32.totalorder %s33, 0
      %p60 = por %p58, %p59
      %s61 = ssub.s32 %s27, %s34
      %p62 = scmp.eq.s32.totalorder %s61, 0
      %s64 = sadd.s32 %s63, 1
      %s65 = scalar_select %p62, %s63, %s64
      %p68 = pneg %p62
      %p69 = scmp.eq.s32.totalorder %s27, 1
      %p70 = por %p68, %p69
      %p71 = scmp.ne.s32.totalorder %s63, %s66
      %p72 = scmp.eq.s32.totalorder %s27, 0
      %p73 = por %p71, %p72
      %p74 = scmp.ne.s32.totalorder %s63, %s66
      %p75 = scmp.eq.s32.totalorder %s32, 1
      %p76 = por %p74, %p75
      %p77 = scmp.ne.s32.totalorder %s66, %s67
      %p78 = scmp.eq.s32.totalorder %s32, 0
      %p79 = por %p77, %p78
      %p80 = scmp.ne.s32.totalorder %s66, %s67
      %p81 = scmp.eq.s32.totalorder %s33, 1
      %p82 = por %p80, %p81
      %p84 = scmp.ne.s32.totalorder %s67, %s83
      %p85 = scmp.eq.s32.totalorder %s33, 0
      %p86 = por %p84, %p85
      %s88 = sadd.s32 %s87, 1
      %p91 = scmp.eq.s32.totalorder %s27, 1
      %p92 = scmp.ne.s32.totalorder %s87, %s89
      %p93 = scmp.eq.s32.totalorder %s27, 0
      %p94 = por %p92, %p93
      %p95 = scmp.ne.s32.totalorder %s87, %s89
      %p96 = scmp.eq.s32.totalorder %s32, 1
      %p97 = por %p95, %p96
      %p98 = scmp.ne.s32.totalorder %s89, %s90
      %p99 = scmp.eq.s32.totalorder %s32, 0
      %p100 = por %p98, %p99
      %p101 = scmp.ne.s32.totalorder %s89, %s90
      %p102 = scmp.eq.s32.totalorder %s33, 1
      %p103 = por %p101, %p102
      %p105 = scmp.ne.s32.totalorder %s90, %s104
      %p106 = scmp.eq.s32.totalorder %s33, 0
      %p107 = por %p105, %p106
      %s109 = sadd.s32 %s108, 1
      %p112 = scmp.eq.s32.totalorder %s27, 1
      %p113 = scmp.ne.s32.totalorder %s108, %s110
      %p114 = scmp.eq.s32.totalorder %s27, 0
      %p115 = por %p113, %p114
      %p116 = scmp.ne.s32.totalorder %s108, %s110
      %p117 = scmp.eq.s32.totalorder %s32, 1
      %p118 = por %p116, %p117
      %p119 = scmp.ne.s32.totalorder %s110, %s111
      %p120 = scmp.eq.s32.totalorder %s32, 0
      %p121 = por %p119, %p120
      %p122 = scmp.ne.s32.totalorder %s110, %s111
      %p123 = scmp.eq.s32.totalorder %s33, 1
      %p124 = por %p122, %p123
      %p126 = scmp.ne.s32.totalorder %s111, %s125
      %p127 = scmp.eq.s32.totalorder %s33, 0
      %p128 = por %p126, %p127
      %s130 = sadd.s32 %s129, 1
      %p133 = scmp.eq.s32.totalorder %s27, 1
      %p134 = scmp.ne.s32.totalorder %s129, %s131
      %p135 = scmp.eq.s32.totalorder %s27, 0
      %p136 = por %p134, %p135
      %p137 = scmp.ne.s32.totalorder %s129, %s131
      %p138 = scmp.eq.s32.totalorder %s32, 1
      %p139 = por %p137, %p138
      %p140 = scmp.ne.s32.totalorder %s131, %s132
      %p141 = scmp.eq.s32.totalorder %s32, 0
      %p142 = por %p140, %p141
      %p143 = scmp.ne.s32.totalorder %s131, %s132
      %p144 = scmp.eq.s32.totalorder %s33, 1
      %p145 = por %p143, %p144
      %p147 = scmp.ne.s32.totalorder %s132, %s146
      %p148 = scmp.eq.s32.totalorder %s33, 0
      %p149 = por %p147, %p148
      %s151 = sadd.s32 %s150, 1
      %p154 = scmp.eq.s32.totalorder %s27, 1
      %p155 = scmp.ne.s32.totalorder %s150, %s152
      %p156 = scmp.eq.s32.totalorder %s27, 0
      %p157 = por %p155, %p156
      %p158 = scmp.ne.s32.totalorder %s150, %s152
      %p159 = scmp.eq.s32.totalorder %s32, 1
      %p160 = por %p158, %p159
      %p161 = scmp.ne.s32.totalorder %s152, %s153
      %p162 = scmp.eq.s32.totalorder %s32, 0
      %p163 = por %p161, %p162
      %p164 = scmp.ne.s32.totalorder %s152, %s153
      %p165 = scmp.eq.s32.totalorder %s33, 1
      %p166 = por %p164, %p165
      %p168 = scmp.ne.s32.totalorder %s153, %s167
      %p169 = scmp.eq.s32.totalorder %s33, 0
      %p170 = por %p168, %p169
      %s172 = sadd.s32 %s171, 1
      %p175 = scmp.eq.s32.totalorder %s27, 1
      %p176 = scmp.ne.s32.totalorder %s171, %s173
      %p177 = scmp.eq.s32.totalorder %s27, 0
      %p178 = por %p176, %p177
      %p179 = scmp.ne.s32.totalorder %s171, %s173
      %p180 = scmp.eq.s32.totalorder %s32, 1
      %p181 = por %p179, %p180
      %p182 = scmp.ne.s32.totalorder %s173, %s174
      %p183 = scmp.eq.s32.totalorder %s32, 0
      %p184 = por %p182, %p183
      %p185 = scmp.ne.s32.totalorder %s173, %s174
      %p186 = scmp.eq.s32.totalorder %s33, 1
      %p187 = por %p185, %p186
      %p189 = scmp.ne.s32.totalorder %s174, %s188
      %p190 = scmp.eq.s32.totalorder %s33, 0
      %p191 = por %p189, %p190
      %s193 = sadd.s32 %s192, 1
      %p196 = scmp.eq.s32.totalorder %s27, 1
      %p197 = scmp.ne.s32.totalorder %s192, %s194
      %p198 = scmp.eq.s32.totalorder %s27, 0
      %p199 = por %p197, %p198
      %p200 = scmp.ne.s32.totalorder %s192, %s194
      %p201 = scmp.eq.s32.totalorder %s32, 1
      %p202 = por %p200, %p201
      %p203 = scmp.ne.s32.totalorder %s194, %s195
      %p204 = scmp.eq.s32.totalorder %s32, 0
      %p205 = por %p203, %p204
      %p206 = scmp.ne.s32.totalorder %s194, %s195
      %p207 = scmp.eq.s32.totalorder %s33, 1
      %p208 = por %p206, %p207
      %p210 = scmp.ne.s32.totalorder %s195, %s209
      %p211 = scmp.eq.s32.totalorder %s33, 0
      %p212 = por %p210, %p211
      %s214 = sadd.s32 %s213, 1
      %p217 = scmp.eq.s32.totalorder %s27, 1
      %p218 = scmp.ne.s32.totalorder %s213, %s215
      %p219 = scmp.eq.s32.totalorder %s27, 0
      %p220 = por %p218, %p219
      %p221 = scmp.ne.s32.totalorder %s213, %s215
      %p222 = scmp.eq.s32.totalorder %s32, 1
      %p223 = por %p221, %p222
      %p224 = scmp.ne.s32.totalorder %s215, %s216
      %p225 = scmp.eq.s32.totalorder %s32, 0
      %p226 = por %p224, %p225
      %p227 = scmp.ne.s32.totalorder %s215, %s216
      %p228 = scmp.eq.s32.totalorder %s33, 1
      %p229 = por %p227, %p228
      %p231 = scmp.ne.s32.totalorder %s216, %s230
      %p232 = scmp.eq.s32.totalorder %s33, 0
      %p233 = por %p231, %p232
      %s235 = sadd.s32 %s234, 1
      %p238 = scmp.eq.s32.totalorder %s27, 1
      %p239 = scmp.ne.s32.totalorder %s234, %s236
      %p240 = scmp.eq.s32.totalorder %s27, 0
      %p241 = por %p239, %p240
      %p242 = scmp.ne.s32.totalorder %s234, %s236
      %p243 = scmp.eq.s32.totalorder %s32, 1
      %p244 = por %p242, %p243
      %p245 = scmp.ne.s32.totalorder %s236, %s237
      %p246 = scmp.eq.s32.totalorder %s32, 0
      %p247 = por %p245, %p246
      %p248 = scmp.ne.s32.totalorder %s236, %s237
      %p249 = scmp.eq.s32.totalorder %s33, 1
      %p250 = por %p248, %p249
      %p252 = scmp.ne.s32.totalorder %s237, %s251
      %p253 = scmp.eq.s32.totalorder %s33, 0
      %p254 = por %p252, %p253
      %s256 = sadd.s32 %s255, 1
      %p259 = scmp.eq.s32.totalorder %s27, 1
      %p260 = scmp.ne.s32.totalorder %s255, %s257
      %p261 = scmp.eq.s32.totalorder %s27, 0
      %p262 = por %p260, %p261
      %p263 = scmp.ne.s32.totalorder %s255, %s257
      %p264 = scmp.eq.s32.totalorder %s32, 1
      %p265 = por %p263, %p264
      %p266 = scmp.ne.s32.totalorder %s257, %s258
      %p267 = scmp.eq.s32.totalorder %s32, 0
      %p268 = por %p266, %p267
      %p269 = scmp.ne.s32.totalorder %s257, %s258
      %p270 = scmp.eq.s32.totalorder %s33, 1
      %p271 = por %p269, %p270
      %p273 = scmp.ne.s32.totalorder %s258, %s272
      %p274 = scmp.eq.s32.totalorder %s33, 0
      %p275 = por %p273, %p274
      %s277 = sadd.s32 %s276, 1
      %p280 = scmp.eq.s32.totalorder %s27, 1
      %p281 = scmp.ne.s32.totalorder %s276, %s278
      %p282 = scmp.eq.s32.totalorder %s27, 0
      %p283 = por %p281, %p282
      %p284 = scmp.ne.s32.totalorder %s276, %s278
      %p285 = scmp.eq.s32.totalorder %s32, 1
      %p286 = por %p284, %p285
      %p287 = scmp.ne.s32.totalorder %s278, %s279
      %p288 = scmp.eq.s32.totalorder %s32, 0
      %p289 = por %p287, %p288
      %p290 = scmp.ne.s32.totalorder %s278, %s279
      %p291 = scmp.eq.s32.totalorder %s33, 1
      %p292 = por %p290, %p291
      %p294 = scmp.ne.s32.totalorder %s279, %s293
      %p295 = scmp.eq.s32.totalorder %s33, 0
      %p296 = por %p294, %p295
      %s297 = ssub.s32 %s27, %s34
      %p298 = scmp.eq.s32.totalorder %s297, 0
      %s300 = sadd.s32 %s299, 1
      %s301 = scalar_select %p298, %s299, %s300
      %p304 = pneg %p298
      %p305 = scmp.eq.s32.totalorder %s27, 1
      %p306 = por %p304, %p305
      %p307 = scmp.ne.s32.totalorder %s299, %s302
      %p308 = scmp.eq.s32.totalorder %s27, 0
      %p309 = por %p307, %p308
      %p310 = scmp.ne.s32.totalorder %s299, %s302
      %p311 = scmp.eq.s32.totalorder %s32, 1
      %p312 = por %p310, %p311
      %p313 = scmp.ne.s32.totalorder %s302, %s303
      %p314 = scmp.eq.s32.totalorder %s32, 0
      %p315 = por %p313, %p314
      %p316 = scmp.ne.s32.totalorder %s302, %s303
      %p317 = scmp.eq.s32.totalorder %s33, 1
      %p318 = por %p316, %p317
      %p320 = scmp.ne.s32.totalorder %s303, %s319
      %p321 = scmp.eq.s32.totalorder %s33, 0
      %p322 = por %p320, %p321
      %s323 = ssub.s32 %s27, %s34
      %p324 = scmp.eq.s32.totalorder %s323, 0
      %s326 = sadd.s32 %s325, 1
      %s327 = scalar_select %p324, %s325, %s326
      %p330 = pneg %p324
      %p331 = scmp.eq.s32.totalorder %s27, 1
      %p332 = por %p330, %p331
      %p333 = scmp.ne.s32.totalorder %s325, %s328
      %p334 = scmp.eq.s32.totalorder %s27, 0
      %p335 = por %p333, %p334
      %p336 = scmp.ne.s32.totalorder %s325, %s328
      %p337 = scmp.eq.s32.totalorder %s32, 1
      %p338 = por %p336, %p337
      %p339 = scmp.ne.s32.totalorder %s328, %s329
      %p340 = scmp.eq.s32.totalorder %s32, 0
      %p341 = por %p339, %p340
      %p342 = scmp.ne.s32.totalorder %s328, %s329
      %p343 = scmp.eq.s32.totalorder %s33, 1
      %p344 = por %p342, %p343
      %p346 = scmp.ne.s32.totalorder %s329, %s345
      %p347 = scmp.eq.s32.totalorder %s33, 0
      %p348 = por %p346, %p347
      %p349 = scmp.le.s32.totalorder 1, %s27
      %p350 = scmp.lt.s32.totalorder %s27, 3
      %p351 = pnand %p349, %p350
      %p352 = pneg %p351
      // Predicated region
      $region9: #{tpu_custom_call.1} parent=5 // pred_check
        _
      $region10: #{tpu_custom_call.1} parent=5 // pred_check_branch
        %354 = sbr.rel (%p351) target = $region12
      $region11: #{tpu_custom_call.1} parent=5 // pred_region
        %s355 = ssub.s32 %s27, 1
        // Predicated region
        $region13: #{tpu_custom_call.1} parent=11 // pred_check
          %p356 = pneg %p100
        $region14: #{tpu_custom_call.1} parent=11 // pred_check_branch
          %358 = sbr.rel (%p356) target = $region16
        $region15: #{tpu_custom_call.1} parent=11 // pred_region
          _
        $region16: #{tpu_custom_call.1} parent=11 // pred_fallthru
          _
        // Predicated region
        $region17: #{tpu_custom_call.1} parent=11 // pred_check
          %p359 = pneg %p121
        $region18: #{tpu_custom_call.1} parent=11 // pred_check_branch
          %361 = sbr.rel (%p359) target = $region20
        $region19: #{tpu_custom_call.1} parent=11 // pred_region
          _
        $region20: #{tpu_custom_call.1} parent=11 // pred_fallthru
          _
        // Predicated region
        $region21: #{tpu_custom_call.1} parent=11 // pred_check
          %p362 = pneg %p142
        $region22: #{tpu_custom_call.1} parent=11 // pred_check_branch
          %364 = sbr.rel (%p362) target = $region24
        $region23: #{tpu_custom_call.1} parent=11 // pred_region
          _
        $region24: #{tpu_custom_call.1} parent=11 // pred_fallthru
          _
        // Predicated region
        $region25: #{tpu_custom_call.1} parent=11 // pred_check
          %p365 = pneg %p163
        $region26: #{tpu_custom_call.1} parent=11 // pred_check_branch
          %367 = sbr.rel (%p365) target = $region28
        $region27: #{tpu_custom_call.1} parent=11 // pred_region
          _
        $region28: #{tpu_custom_call.1} parent=11 // pred_fallthru
          _
        // Predicated region
        $region29: #{tpu_custom_call.1} parent=11 // pred_check
          %p368 = pneg %p184
        $region30: #{tpu_custom_call.1} parent=11 // pred_check_branch
          %370 = sbr.rel (%p368) target = $region32
        $region31: #{tpu_custom_call.1} parent=11 // pred_region
          _
        $region32: #{tpu_custom_call.1} parent=11 // pred_fallthru
          _
        // Predicated region
        $region33: #{tpu_custom_call.1} parent=11 // pred_check
          %p371 = pneg %p205
        $region34: #{tpu_custom_call.1} parent=11 // pred_check_branch
          %373 = sbr.rel (%p371) target = $region36
        $region35: #{tpu_custom_call.1} parent=11 // pred_region
          _
        $region36: #{tpu_custom_call.1} parent=11 // pred_fallthru
          _
        // Predicated region
        $region37: #{tpu_custom_call.1} parent=11 // pred_check
          %p374 = pneg %p226
        $region38: #{tpu_custom_call.1} parent=11 // pred_check_branch
          %376 = sbr.rel (%p374) target = $region40
        $region39: #{tpu_custom_call.1} parent=11 // pred_region
          _
        $region40: #{tpu_custom_call.1} parent=11 // pred_fallthru
          _
        // Predicated region
        $region41: #{tpu_custom_call.1} parent=11 // pred_check
          %p377 = pneg %p247
        $region42: #{tpu_custom_call.1} parent=11 // pred_check_branch
          %379 = sbr.rel (%p377) target = $region44
        $region43: #{tpu_custom_call.1} parent=11 // pred_region
          _
        $region44: #{tpu_custom_call.1} parent=11 // pred_fallthru
          _
        // Predicated region
        $region45: #{tpu_custom_call.1} parent=11 // pred_check
          %p380 = pneg %p268
        $region46: #{tpu_custom_call.1} parent=11 // pred_check_branch
          %382 = sbr.rel (%p380) target = $region48
        $region47: #{tpu_custom_call.1} parent=11 // pred_region
          _
        $region48: #{tpu_custom_call.1} parent=11 // pred_fallthru
          _
        // Predicated region
        $region49: #{tpu_custom_call.1} parent=11 // pred_check
          %p383 = pneg %p289
        $region50: #{tpu_custom_call.1} parent=11 // pred_check_branch
          %385 = sbr.rel (%p383) target = $region52
        $region51: #{tpu_custom_call.1} parent=11 // pred_region
          _
        $region52: #{tpu_custom_call.1} parent=11 // pred_fallthru
          _
      $region12: #{tpu_custom_call.1} parent=5 // pred_fallthru
        _
      %p386 = scmp.lt.s32.totalorder %s27, 2
      // Predicated region
      $region53: #{tpu_custom_call.1} parent=5 // pred_check
        %p387 = pneg %p386
      $region54: #{tpu_custom_call.1} parent=5 // pred_check_branch
        %389 = sbr.rel (%p387) target = $region56
      $region55: #{tpu_custom_call.1} parent=5 // pred_region
        // Predicated region
        $region57: #{tpu_custom_call.1} parent=55 // pred_check
          %p390 = pneg %p47
        $region58: #{tpu_custom_call.1} parent=55 // pred_check_branch
          %392 = sbr.rel (%p390) target = $region60
        $region59: #{tpu_custom_call.1} parent=55 // pred_region
          %p393 = scmp.lt.s32.totalorder %s27, 1
          %s394 = scalar_select %p393, %s27, 1
          %s395 = smul.addr %s394, 8
          %s396 = scalar_lea.vmem %s0, %s395
        $region60: #{tpu_custom_call.1} parent=55 // pred_fallthru
          _
        // Predicated region
        $region61: #{tpu_custom_call.1} parent=55 // pred_check
          %p397 = pneg %p73
        $region62: #{tpu_custom_call.1} parent=55 // pred_check_branch
          %399 = sbr.rel (%p397) target = $region64
        $region63: #{tpu_custom_call.1} parent=55 // pred_region
          %p400 = scmp.lt.s32.totalorder %s27, 1
          %s401 = scalar_select %p400, %s27, 1
          %s402 = smul.addr %s401, 8
          %s403 = scalar_lea.vmem %s1, %s402
        $region64: #{tpu_custom_call.1} parent=55 // pred_fallthru
          _
      $region56: #{tpu_custom_call.1} parent=5 // pred_fallthru
        _
      %p404 = scmp.le.s32.totalorder 1, %s27
      %p405 = scmp.lt.s32.totalorder %s27, 3
      %p406 = pnand %p404, %p405
      %p407 = pneg %p406
      // Predicated region
      $region65: #{tpu_custom_call.1} parent=5 // pred_check
        _
      $region66: #{tpu_custom_call.1} parent=5 // pred_check_branch
        %409 = sbr.rel (%p406) target = $region68
      $region67: #{tpu_custom_call.1} parent=5 // pred_region
        %s410 = ssub.s32 %s27, 1
        %p411 = scmp.lt.s32.totalorder %s32, 1
        %s412 = scalar_select %p411, %s32, 1
        %s413 = smul.addr %s412, 8
        %s414 = scalar_lea.vmem %s0, %s413
        %p415 = pneg %p53
        %p416 = pneg %p50
        %p417 = scmp.lt.s32.totalorder %s32, 1
        %s418 = scalar_select %p417, %s32, 1
        %s419 = smul.addr %s418, 8
        %s420 = scalar_lea.vmem %s1, %s419
        %p421 = pneg %p79
        %p422 = pneg %p76
        %p423 = pneg %p100
        %p424 = pneg %p97
        %p425 = pneg %p121
        %p426 = pneg %p118
        %p427 = pneg %p142
        %p428 = pneg %p139
        %p429 = pneg %p163
        %p430 = pneg %p160
        %p431 = pneg %p184
        %p432 = pneg %p181
        %p433 = pneg %p205
        %p434 = pneg %p202
        %p435 = pneg %p226
        %p436 = pneg %p223
        %p437 = pneg %p247
        %p438 = pneg %p244
        %p439 = pneg %p268
        %p440 = pneg %p265
        %p441 = pneg %p289
        %p442 = pneg %p286
        %p443 = pneg %p315
        %p444 = pneg %p312
        %s445 = sand.u32 %s302, 1
        %s446 = scalar_lea.sflag [#allocation5], %s445
        %s447 = sand.u32 %s302, 1
        %s448 = smul.addr %s447, 8
        %s449 = scalar_lea.vmem [#allocation4], %s448
        %p450 = pneg %p341
        %p451 = pneg %p338
        %p452 = scmp.lt.s32.totalorder %s32, 1
        %s453 = scalar_select %p452, %s32, 1
        %s454 = smul.addr %s453, 8
        %s455 = scalar_lea.vmem %s13, %s454
        %p456 = scmp.lt.s32.totalorder %s32, 1
        %s457 = scalar_select %p456, %s32, 1
        %s458 = smul.addr %s457, 8
        %s459 = scalar_lea.vmem %s0, %s458
        %p460 = scmp.lt.s32.totalorder %s32, 1
        %s461 = scalar_select %p460, %s32, 1
        %s462 = smul.addr %s461, 8
        %s463 = scalar_lea.vmem %s1, %s462
        %p464 = scmp.lt.s32.totalorder %s32, 1
        %s465 = scalar_select %p464, %s32, 1
        %s466 = smul.addr %s465, 8
        %s467 = scalar_lea.vmem %s13, %s466
        %v468 = vld [vmem:[%s459] sm:$0xff]
        %v469 = vld [vmem:[%s2] sm:$0xff]
        %v470 = vld [vmem:[%s2 + $0x8] sm:$0xff]
        %v471 = vld [vmem:[%s2 + $0x10] sm:$0xff]
        %v472 = vld [vmem:[%s2 + $0x18] sm:$0xff]
        %v473 = vld [vmem:[%s3] sm:$0x1]
        %v475 = vperm.slane %v473, 0
        %vm477 = vcmask 261120
        %v479 = vsel %vm477, %v468, 0
        %481 = vmatpush.msra.mxu0 0.0
        %482 = vmatpush.msra.mxu0 0.0
        %483 = vmatpush.msra.mxu0 0.0
        %484 = vmatpush.msra.mxu0 0.0
        %485 = vmatpush.msra.mxu0 0.0
        %486 = vmatpush.msra.mxu0 0.0
        %487 = vmatpush.msra.mxu0 0.0
        %488 = vmatpush.msra.mxu0 0.0
        %489 = vmatpush.msra.mxu0 0.0
        %490 = vmatpush.msra.mxu0 0.0
        %491 = vmatpush.msra.mxu0 0.0
        %492 = vmatpush.msra.mxu0 0.0
        %493 = vmatpush.msra.mxu0 %v472
        %494 = vmatpush.msra.mxu0 %v471
        %495 = vmatpush.msra.mxu0 %v470
        %496 = vmatpush.msra.mxu0 %v469
        %497 = vmatmul.f32.gmra.mxu0 %v479
        %v498 = vpop.f32.mrf.mxu0
        %v499 = vadd.f32 %v475, %v498
        %500 = vdwg.mxu0
        %vm501 = vcmp.ge.f32.partialorder %v499, 0.0
        %v502 = vld [vmem:[#allocation2] sm:$0x1]
        %v504 = vperm.slane %v502, 0
        %505 = vset.pattern.permute.xlu0 0
        %506 = vperm.xlu0 %505, %v504
        %v507 = vpop.permute.xlu0 %506
        %v509 = vmul.f32 %v507, %v499
        %v510 = vsel %vm501, %v499, %v509
        %v511 = vld [vmem:[%s5] sm:$0xff]
        %v512 = vld [vmem:[%s5 + $0x8] sm:$0xff]
        %v513 = vld [vmem:[%s6] sm:$0x1]
        %v515 = vperm.slane %v513, 0
        %vm517 = vcmask 130048
        %v519 = vsel %vm517, %v510, 0
        %521 = vmatpush.msra.mxu0 0.0
        %522 = vmatpush.msra.mxu0 0.0
        %523 = vmatpush.msra.mxu0 0.0
        %524 = vmatpush.msra.mxu0 0.0
        %525 = vmatpush.msra.mxu0 0.0
        %526 = vmatpush.msra.mxu0 0.0
        %527 = vmatpush.msra.mxu0 0.0
        %528 = vmatpush.msra.mxu0 0.0
        %529 = vmatpush.msra.mxu0 0.0
        %530 = vmatpush.msra.mxu0 0.0
        %531 = vmatpush.msra.mxu0 0.0
        %532 = vmatpush.msra.mxu0 0.0
        %533 = vmatpush.msra.mxu0 0.0
        %534 = vmatpush.msra.mxu0 0.0
        %535 = vmatpush.msra.mxu0 %v512
        %536 = vmatpush.msra.mxu0 %v511
        %537 = vmatmul.f32.gmra.mxu0 %v519
        %v538 = vpop.f32.mrf.mxu0
        %v539 = vadd.f32 %v515, %v538
        %540 = vdwg.mxu0
        %v541 = vtanh.pop %v539
        %v542 = vadd.f32 %v541, 1.0
        %v543 = vmul.f32 %v542, 0.5
        %vm544 = vcmask 523264
        %545 = vst.msk [vmem:[%s449] sm:$0xff] %vm544, %v543
        %v546 = vld [vmem:[%s7] sm:$0xff]
        %v547 = vld [vmem:[%s7 + $0x8] sm:$0xff]
        %v548 = vld [vmem:[%s7 + $0x10] sm:$0xff]
        %v549 = vld [vmem:[%s7 + $0x18] sm:$0xff]
        %v550 = vld [vmem:[%s8] sm:$0x1]
        %v552 = vperm.slane %v550, 0
        %554 = vmatpush.msra.mxu0 0.0
        %555 = vmatpush.msra.mxu0 0.0
        %556 = vmatpush.msra.mxu0 0.0
        %557 = vmatpush.msra.mxu0 0.0
        %558 = vmatpush.msra.mxu0 0.0
        %559 = vmatpush.msra.mxu0 0.0
        %560 = vmatpush.msra.mxu0 0.0
        %561 = vmatpush.msra.mxu0 0.0
        %562 = vmatpush.msra.mxu0 0.0
        %563 = vmatpush.msra.mxu0 0.0
        %564 = vmatpush.msra.mxu0 0.0
        %565 = vmatpush.msra.mxu0 0.0
        %566 = vmatpush.msra.mxu0 %v549
        %567 = vmatpush.msra.mxu0 %v548
        %568 = vmatpush.msra.mxu0 %v547
        %569 = vmatpush.msra.mxu0 %v546
        %570 = vmatmul.f32.gmra.mxu0 %v479
        %v571 = vpop.f32.mrf.mxu0
        %v572 = vadd.f32 %v552, %v571
        %573 = vdwg.mxu0
        %vm574 = vcmp.ge.f32.partialorder %v572, 0.0
        %v575 = vld [vmem:[#allocation3] sm:$0x1]
        %v577 = vperm.slane %v575, 0
        %578 = vset.pattern.permute.xlu0 0
        %579 = vperm.xlu0 %578, %v577
        %v580 = vpop.permute.xlu0 %579
        %v582 = vmul.f32 %v580, %v572
        %v583 = vsel %vm574, %v572, %v582
        %v584 = vld [vmem:[%s10] sm:$0xff]
        %v585 = vld [vmem:[%s10 + $0x8] sm:$0xff]
        %v586 = vld [vmem:[%s10 + $0x10] sm:$0xff]
        %v587 = vld [vmem:[%s10 + $0x18] sm:$0xff]
        %v588 = vld [vmem:[%s10 + $0x20] sm:$0xff]
        %v589 = vld [vmem:[%s10 + $0x28] sm:$0xff]
        %v590 = vld [vmem:[%s10 + $0x30] sm:$0xff]
        %v591 = vld [vmem:[%s10 + $0x38] sm:$0xff]
        %v592 = vld [vmem:[%s10 + $0x40] sm:$0xff]
        %v593 = vld [vmem:[%s10 + $0x48] sm:$0xff]
        %v594 = vld [vmem:[%s10 + $0x50] sm:$0xff]
        %v595 = vld [vmem:[%s10 + $0x58] sm:$0xff]
        %v596 = vld [vmem:[%s10 + $0x60] sm:$0xf]
        %v597 = vld [vmem:[%s11] sm:$0x1]
        %v599 = vperm.slane %v597, 0
        %vm601 = vcmask 818176
        %v603 = vsel %vm601, %v583, 0
        %vm605 = vcmask 1043456
        %v607 = vsel %vm605, %v596, 0
        %609 = vmatpush.msra.mxu0 0.0
        %610 = vmatpush.msra.mxu0 0.0
        %611 = vmatpush.msra.mxu0 0.0
        %612 = vmatpush.msra.mxu0 %v607
        %613 = vmatpush.msra.mxu0 %v595
        %614 = vmatpush.msra.mxu0 %v594
        %615 = vmatpush.msra.mxu0 %v593
        %616 = vmatpush.msra.mxu0 %v592
        %617 = vmatpush.msra.mxu0 %v591
        %618 = vmatpush.msra.mxu0 %v590
        %619 = vmatpush.msra.mxu0 %v589
        %620 = vmatpush.msra.mxu0 %v588
        %621 = vmatpush.msra.mxu0 %v587
        %622 = vmatpush.msra.mxu0 %v586
        %623 = vmatpush.msra.mxu0 %v585
        %624 = vmatpush.msra.mxu0 %v584
        %625 = vmatmul.f32.gmra.mxu0 %v603
        %v626 = vpop.f32.mrf.mxu0
        %v627 = vadd.f32 %v599, %v626
        %628 = vdwg.mxu0
        %v629 = vmax.f32 %v627, 0.0
        %v630 = vld [vmem:[%s463] sm:$0xff]
        %v631 = vmul.f32 %v629, %v630
        %vm632 = vcmask 31744
        %633 = vst.msk [vmem:[%s467] sm:$0xff] %vm632, %v631
        %s634 = sand.u32 %s302, 1
        %s635 = scalar_lea.sflag [#allocation5], %s634
        %s636 = sand.u32 %s302, 1
        %s637 = smul.addr %s636, 8
        %s638 = scalar_lea.vmem [#allocation4], %s637
        %p639 = scmp.lt.s32.totalorder %s32, 1
        %s640 = scalar_select %p639, %s32, 1
        %s641 = smul.addr %s640, 8
        %s642 = scalar_lea.vmem %s13, %s641
        // Predicated region
        $region69: #{tpu_custom_call.1} parent=67 // pred_check
          %p643 = pneg %p312
        $region70: #{tpu_custom_call.1} parent=67 // pred_check_branch
          %645 = sbr.rel (%p643) target = $region72
        $region71: #{tpu_custom_call.1} parent=67 // pred_region
          %647 = vsyncadd %s635, 0
          %s648 = smul.addr %s32, 8
          %s649 = scalar_lea.hbm %s12, %s648
          %s651 = sshll.u32 %s638, 4
          %s652 = int_to_ptr.vmem [resolvable:$true] %s651
          %s653 = sshll.u32 %s649, 4
          %s654 = int_to_ptr.hbm [resolvable:$true] %s653
          %656 = dma.vmem_to_hbm [thread:$0]  %s652, 128, %s654, %s635
        $region72: #{tpu_custom_call.1} parent=67 // pred_fallthru
          _
        // Predicated region
        $region73: #{tpu_custom_call.1} parent=67 // pred_check
          %p657 = pneg %p338
        $region74: #{tpu_custom_call.1} parent=67 // pred_check_branch
          %659 = sbr.rel (%p657) target = $region76
        $region75: #{tpu_custom_call.1} parent=67 // pred_region
          _
        $region76: #{tpu_custom_call.1} parent=67 // pred_fallthru
          _
      $region68: #{tpu_custom_call.1} parent=5 // pred_fallthru
        _
      %p660 = scmp.le.s32.totalorder 2, %s27
      // Predicated region
      $region77: #{tpu_custom_call.1} parent=5 // pred_check
        %p661 = pneg %p660
      $region78: #{tpu_custom_call.1} parent=5 // pred_check_branch
        %663 = sbr.rel (%p661) target = $region80
      $region79: #{tpu_custom_call.1} parent=5 // pred_region
        %s664 = ssub.s32 %s27, 2
        // Predicated region
        $region81: #{tpu_custom_call.1} parent=79 // pred_check
          %p665 = pneg %p318
        $region82: #{tpu_custom_call.1} parent=79 // pred_check_branch
          %667 = sbr.rel (%p665) target = $region84
        $region83: #{tpu_custom_call.1} parent=79 // pred_region
          %s668 = sand.u32 %s303, 1
          %s669 = scalar_lea.sflag [#allocation5], %s668
          %s670 = sand.u32 %s303, 1
          %s671 = smul.addr %s670, 8
          %s672 = scalar_lea.vmem [#allocation4], %s671
          %674 = dma.done %s669, 128
        $region84: #{tpu_custom_call.1} parent=79 // pred_fallthru
          _
        // Predicated region
        $region85: #{tpu_custom_call.1} parent=79 // pred_check
          %p675 = pneg %p344
        $region86: #{tpu_custom_call.1} parent=79 // pred_check_branch
          %677 = sbr.rel (%p675) target = $region88
        $region87: #{tpu_custom_call.1} parent=79 // pred_region
          %p678 = scmp.lt.s32.totalorder %s33, 1
          %s679 = scalar_select %p678, %s33, 1
          %s680 = smul.addr %s679, 8
          %s681 = scalar_lea.vmem %s13, %s680
        $region88: #{tpu_custom_call.1} parent=79 // pred_fallthru
          _
      $region80: #{tpu_custom_call.1} parent=5 // pred_fallthru
        _
    $region6: #{tpu_custom_call.1} parent=1 // loop_footer
      %s31 = sadd.s32 1, %s27
    $region7: #{tpu_custom_call.1} parent=1 // loop_footer_branch
      %26 = sbr.rel target = $region3
    $region8: #{tpu_custom_call.1} parent=1 // loop_exit
      _
    %682 = vsyncpa [#allocation5], 1
    %s683 = scalar_lea.sflag [#allocation5], 1
    %684 = vsyncpa %s683, 1

</llo_original>
